<compile_context>
chip_gen: v5e
topology: v5e:2x2
jax: 0.10.0
libtpu: 0.0.40
codegen_flags: <defaults>
</compile_context>

<pallas_src>
import jax
import jax.numpy as jnp
from jax.experimental import pallas as pl
from jax.experimental.pallas import tpu as pltpu


# TODO(synk): base-class forward() raises NotImplementedError in PyTorch; the
# only device-side semantics available is identity, implemented below.
def _identity_kernel(x_ref, o_ref):
    # Whole-tile load -> store (pass-through on the current block).
    o_ref[...] = x_ref[...]


def _choose_lane_dense_shape(total):
    """Pick a (rows, cols) view with cols a large multiple of 128 dividing total."""
    for cols in (16384, 8192, 4096, 2048, 1024, 512, 256, 128):
        if total % cols == 0:
            return total // cols, cols
    return None


def _choose_tile_rows(rows, cols, itemsize, max_tile_bytes=2 * 1024 * 1024):
    """Largest row-tile that divides `rows`, is a multiple of 8, and keeps the
    tile under ~2 MiB (so double-buffered in+out stays <= ~8 MiB: fits v5e's
    16 MiB scoped VMEM default and v7x's smaller 64 MiB physical VMEM)."""
    if rows % 8 != 0:
        return rows  # single full-extent block (block dim == array dim is legal)
    cap = max(8, max_tile_bytes // (cols * itemsize))
    for cand in (4096, 2048, 1024, 512, 256, 128, 64, 32, 16, 8):
        if cand <= cap and rows % cand == 0:
            return cand
    return rows


def _pallas_identity_2d(x2d, tile_r):
    rows, cols = x2d.shape
    grid = (rows // tile_r,)
    nbytes = x2d.size * x2d.dtype.itemsize
    return pl.pallas_call(
        _identity_kernel,
        out_shape=jax.ShapeDtypeStruct((rows, cols), x2d.dtype),
        grid_spec=pl.GridSpec(
            grid=grid,
            in_specs=[pl.BlockSpec((tile_r, cols), lambda i: (i, 0))],
            out_specs=pl.BlockSpec((tile_r, cols), lambda i: (i, 0)),
        ),
        # Output aliases the input buffer: with a donated input at the jit
        # boundary this removes the HBM round trip entirely; without donation
        # XLA keeps the caller's copy valid.
        input_output_aliases={0: 0},
        cost_estimate=pl.CostEstimate(
            flops=0, transcendentals=0, bytes_accessed=2 * nbytes),
        compiler_params=pltpu.CompilerParams(
            dimension_semantics=("parallel",),
        ),
    )(x2d)


class Model:
    """JAX/Pallas mirror of the abstract PyTorch `Model` base class.

    Holds no parameters (matching the nn.Module base with no layers).  Its
    `forward` — which in PyTorch raises NotImplementedError — is realized here
    as the identity map executed through a Pallas TPU kernel.  All
    save/load/checkpoint helpers are host filesystem side effects and are not
    translated to device code.
    """

    def __init__(self, filepath=None):
        self.filepath = filepath or "default_model.pt"
        self.trainer_config = ""

    def forward(self, x):
        # x: (N, C, H, W) float32, NCHW (PyTorch convention).
        n, c, h, w = x.shape
        total = x.size

        shape2d = _choose_lane_dense_shape(total)
        if shape2d is None:
            # Element count not a multiple of 128: use a single full-array
            # block (no (8,128) padding needed when block dims == array dims).
            rows, cols = n * c * h, w
        else:
            rows, cols = shape2d

        # Metadata-only reshape to a lane-dense 2-D slab (no pad, no slice).
        x2d = x.reshape(rows, cols)
        tile_r = _choose_tile_rows(rows, cols, x.dtype.itemsize)
        y2d = _pallas_identity_2d(x2d, tile_r)
        return y2d.reshape(n, c, h, w)

    def __call__(self, x):
        return self.forward(x)


if __name__ == "__main__":
    key = jax.random.PRNGKey(0)
    # Small NCHW input consistent with a conv-style CVAE: batch=2, channels=4,
    # spatial 16x16.
    x = jax.random.normal(key, (2, 4, 16, 16), dtype=jnp.float32)

    model = Model()
    y = model(x)
    y = jax.block_until_ready(y)

    # Correctness check against the (identity) reference semantics.
    assert y.shape == x.shape and y.dtype == x.dtype
    assert bool(jnp.allclose(y, x)), "Pallas identity kernel mismatch"

    print("KERNEL_OK")
</pallas_src>

<mosaic_0001>
module attributes {stable_mosaic.version = 11 : i64} {
  func.func @_identity_kernel(%arg0: i32, %arg1: memref<1x2048xf32, #tpu.memory_space<vmem>>, %arg2: memref<1x2048xf32, #tpu.memory_space<vmem>>) attributes {dimension_semantics = [#tpu.dimension_semantics<parallel>], iteration_bounds = array<i64: 1>, scalar_prefetch = 0 : i64, scratch_operands = 0 : i64, tpu.core_type = #tpu.core_type<tc>, window_params = [{transform_indices = @transform_0, window_bounds = array<i64: 1, 2048>}, {transform_indices = @transform_1, window_bounds = array<i64: 1, 2048>}]} {
    %c0 = arith.constant 0 : index
    %c0_0 = arith.constant 0 : index
    %0 = vector.load %arg1[%c0, %c0_0] : memref<1x2048xf32, #tpu.memory_space<vmem>>, vector<1x2048xf32>
    %c0_1 = arith.constant 0 : index
    %c0_2 = arith.constant 0 : index
    %1 = vector.load %arg2[%c0_1, %c0_2] : memref<1x2048xf32, #tpu.memory_space<vmem>>, vector<1x2048xf32>
    tpu.vector_store %arg2[%c0_1, %c0_2], %0 {strides = array<i32>} : memref<1x2048xf32, #tpu.memory_space<vmem>>, vector<1x2048xf32>,
    return
  }
  func.func @transform_0(%arg0: i32) -> (i32, i32) {
    %c0_i32 = arith.constant 0 : i32
    %c0_i32_0 = arith.constant 0 : i32
    return %arg0, %c0_i32 : i32, i32
  }
  func.func @transform_1(%arg0: i32) -> (i32, i32) {
    %c0_i32 = arith.constant 0 : i32
    %c0_i32_0 = arith.constant 0 : i32
    return %arg0, %c0_i32 : i32, i32
  }
}

</mosaic_0001>

<llo_original>
// kernel: tpu_custom_call.1
$region0: #{tpu_custom_call.1}
  #allocation0 [shape = 'u32[]', space=smem, size = 0x4, offset = 0x4, fixed_abs, tag = 'smem constant byte address 0x4 - core index']
  #allocation1 [shape = 'u32[72,128]{1,0:T(1,128)}', space=vmem, size = 0x9000, scoped, tag = 'internal scratch']
  %s0 = inlined_call_operand.hbm [shape: f32[1,2048], index: 0, kind: input, shape index: {}, may-alias: {0,1}]
  %s1 = inlined_call_operand.hbm [shape: f32[1,2048], index: 1, kind: output, shape index: {}, may-alias: {0,1}]
  %s2 = sld [smem:[#allocation0]]
  $region18: #{tpu_custom_call.1} parent=0
    _
  %s4 = ssub.s32 1, %s2
  %s5 = scalar_select 0, %s4, %s2
  $region1: #{tpu_custom_call.1} parent=0
    #allocation2 [shape = 'u8[8192]{0}', space=vmem, size = 0x2000, scoped, tag = 'input window, operand 0, single buffered']
    #allocation3 [shape = 's32[1]{0}', space=sflag, size = 0x4, scoped, tag = 'scoped memory for tpu_custom_call.1']
    #allocation4 [shape = 's32[1]{0}', space=sflag, size = 0x4, scoped, tag = 'scoped memory for tpu_custom_call.1']
    #allocation5 [shape = 'u8[8192]{0}', space=vmem, size = 0x2000, scoped, tag = 'output window, operand 0, single buffered']
    %6 = vsyncpa [#allocation3], 0
    %7 = vsyncpa [#allocation4], 0
    // Predicated region
    $region2: #{tpu_custom_call.1} parent=1 // pred_check
      _
    $region3: #{tpu_custom_call.1} parent=1 // pred_check_branch
      %9 = sbr.rel (0) target = $region5
    $region4: #{tpu_custom_call.1} parent=1 // pred_region
      %11 = vsyncadd [#allocation3], 0
      %s13 = sshll.u32 %s0, 4
      %s14 = int_to_ptr.hbm [resolvable:$true] %s13
      %s15 = sshll.u32 [#allocation2], 4
      %s16 = int_to_ptr.vmem [resolvable:$true] %s15
      %18 = dma.hbm_to_vmem [thread:$0]  %s14, 256, %s16, [#allocation3]
    $region5: #{tpu_custom_call.1} parent=1 // pred_fallthru
      _
    // Predicated region
    $region6: #{tpu_custom_call.1} parent=1 // pred_check
      _
    $region7: #{tpu_custom_call.1} parent=1 // pred_check_branch
      %20 = sbr.rel (0) target = $region9
    $region8: #{tpu_custom_call.1} parent=1 // pred_region
      %22 = dma.done [#allocation3], 256
    $region9: #{tpu_custom_call.1} parent=1 // pred_fallthru
      _
    %v23 = vld [vmem:[#allocation2] sm:$0xff]
    %v24 = vld [vmem:[#allocation2 + $0x8] sm:$0xff]
    %25 = vst [vmem:[#allocation5] sm:$0xff] %v23
    %26 = vst [vmem:[#allocation5 + $0x8] sm:$0xff] %v24
    // Predicated region
    $region10: #{tpu_custom_call.1} parent=1 // pred_check
      _
    $region11: #{tpu_custom_call.1} parent=1 // pred_check_branch
      %28 = sbr.rel (0) target = $region13
    $region12: #{tpu_custom_call.1} parent=1 // pred_region
      %30 = vsyncadd [#allocation4], 0
      %s32 = sshll.u32 [#allocation5], 4
      %s33 = int_to_ptr.vmem [resolvable:$true] %s32
      %s34 = sshll.u32 %s1, 4
      %s35 = int_to_ptr.hbm [resolvable:$true] %s34
      %37 = dma.vmem_to_hbm [thread:$0]  %s33, 256, %s35, [#allocation4]
    $region13: #{tpu_custom_call.1} parent=1 // pred_fallthru
      _
    // Predicated region
    $region14: #{tpu_custom_call.1} parent=1 // pred_check
      _
    $region15: #{tpu_custom_call.1} parent=1 // pred_check_branch
      %39 = sbr.rel (0) target = $region17
    $region16: #{tpu_custom_call.1} parent=1 // pred_region
      %41 = dma.done [#allocation4], 256
    $region17: #{tpu_custom_call.1} parent=1 // pred_fallthru
      _
    %42 = vsyncpa [#allocation3], 1
    %43 = vsyncpa [#allocation4], 1

</llo_original>
